<compile_context>
chip_gen: v5e
topology: v5e:2x2
jax: 0.10.0
libtpu: 0.0.40
codegen_flags: <defaults>
</compile_context>

<pallas_src>
import functools

import jax
import jax.numpy as jnp
from jax.experimental import pallas as pl
from jax.experimental.pallas import tpu as pltpu


# ----------------------------------------------------------------------------
# Pallas kernel: CoordWarpNet forward for one (batch, pixel-tile) grid step.
#   h = relu(w1x*x + w1y*y + lat_proj)        (lat_proj = W1_lat @ lat + b1, precomputed)
#   h = relu(W2 @ h + b2)                     (bf16 MXU, f32 accumulate)
#   y = tanh(w3 . h + b3)                     (VPU + sublane reduce, 2 output channels)
# Internal layout is channel-major: hidden state is (D, TN) with pixels on the lane axis,
# so every VPU/MXU op and the output store are lane-dense.
# ----------------------------------------------------------------------------
def coordwarp_kernel(lat_ref, slab_ref, w2_ref, b3_ref, out_ref, *, H, W, tn):
    n = pl.program_id(1)

    # Pixel indices of this tile, generated in-kernel (coords are a pure function of the
    # pixel index; no coords DMA / BlockSpec at all).
    p = jax.lax.broadcasted_iota(jnp.int32, (1, tn), 1) + n * tn          # (1, TN)
    p_f = p.astype(jnp.float32)
    # row/col via float reciprocal-multiply instead of int32 // and % (which lower to long
    # multi-op VPU sequences). The +0.5 keeps floor() from landing one below an exact
    # multiple of W; exact for pixel indices < 2**24 (any realistic resolution).
    row = jnp.floor((p_f + 0.5) * jnp.float32(1.0 / W))                   # (1, TN)
    col = p_f - row * jnp.float32(W)                                      # (1, TN)
    sx = jnp.float32(2.0 / (W - 1)) if W > 1 else jnp.float32(0.0)        # linspace(-1,1,1) == -1
    sy = jnp.float32(2.0 / (H - 1)) if H > 1 else jnp.float32(0.0)
    x_row = col * sx - 1.0                                                # (1, TN)
    y_row = row * sy - 1.0                                                # (1, TN)

    lat_col = lat_ref[0]                 # (D, 1): struc_w @ W1_lat^T + b1 for this batch
    w1x = slab_ref[:, 0:1]               # (D, 1)
    w1y = slab_ref[:, 1:2]               # (D, 1)
    b2 = slab_ref[:, 2:3]                # (D, 1)
    w3a = slab_ref[:, 3:4]               # (D, 1)
    w3b = slab_ref[:, 4:5]               # (D, 1)

    # conv1_1 + ReLU: K=2 contraction as VPU broadcast-FMAs (f32, lane-dense), no MXU.
    h = jnp.maximum(w1x * x_row + w1y * y_row + lat_col, 0.0)             # (D, TN) f32

    # conv1_2 + ReLU: bf16 operands into the MXU, f32 accumulate, f32 bias/ReLU
    # (elementwise math stays f32 -> safe on v5e's f32-only VPU/EUP).
    h = jnp.dot(w2_ref[...], h.astype(jnp.bfloat16),
                preferred_element_type=jnp.float32) + b2
    h = jnp.maximum(h, 0.0)                                               # (D, TN) f32

    # conv1_3 + tanh: the M=2 projection stays OFF the MXU -> full-vreg VPU multiplies +
    # sublane reduction (the VPU/XLU have slack; MXU streaming is ~independent of M).
    y0 = jnp.sum(h * w3a, axis=0, keepdims=True) + b3_ref[0]              # (1, TN)
    y1 = jnp.sum(h * w3b, axis=0, keepdims=True) + b3_ref[1]              # (1, TN)
    y = jnp.tanh(jnp.concatenate([y0, y1], axis=0))                       # (2, TN) f32
    out_ref[...] = y[None]                                                # (1, 2, TN)


# ----------------------------------------------------------------------------
# Tile selection + pallas_call wrapper.
# ----------------------------------------------------------------------------
_TN_CAP = 16384  # pixels/tile: ~20 MiB of live f32 intermediates at D=64 (fits 48 MiB budget
                 # on every generation, incl. v7x's 64 MiB physical VMEM per TensorCore).


def _choose_tn(N, B):
    """Largest multiple-of-128 divisor of N that is <= _TN_CAP (or N itself when small),
    then halved until the "parallel" grid has >= 2 steps (v7x has 2 TensorCores/chip)."""
    if N <= _TN_CAP:
        tn = N
    elif N % 128 == 0:
        tn = 128
        for d in range(256, _TN_CAP + 1, 128):
            if N % d == 0:
                tn = d
    else:
        tn = N  # degenerate large non-128-multiple N: single tile (keeps the (8,128) rule)
    while B * (N // tn) < 2 and tn % 256 == 0:
        tn //= 2
    return tn


def coordwarp_pallas(lat_proj, slab, w2_bf16, b3, *, H, W, tn=None):
    """lat_proj: (B, D, 1) f32  precomputed latent projection (+ b1), per batch.
       slab:     (D, 8)  f32    packed [w1x | w1y | b2 | w3_row0 | w3_row1 | 0 | 0 | 0].
       w2_bf16:  (D, D)  bf16   conv1_2 weight.
       b3:       (2,)    f32    conv1_3 bias (SMEM scalars).
       Returns warp_coords: (B, 2, H, W) float32 (channel-major; the reshape is free)."""
    B, D, _ = lat_proj.shape
    N = H * W
    if tn is None:
        tn = _choose_tn(N, B)
    assert N % tn == 0 and (tn == N or tn % 128 == 0)

    fixed = lambda b, n: (0, 0)  # weights stay resident across the whole grid
    out = pl.pallas_call(
        functools.partial(coordwarp_kernel, H=H, W=W, tn=tn),
        out_shape=jax.ShapeDtypeStruct((B, 2, N), jnp.float32),
        grid=(B, N // tn),
        in_specs=[
            pl.BlockSpec((1, D, 1), lambda b, n: (b, 0, 0)),           # lat_proj (per batch)
            pl.BlockSpec((D, 8), fixed),                               # packed small operands
            pl.BlockSpec((D, D), fixed),                               # W2 (bf16)
            pl.BlockSpec(memory_space=pltpu.MemorySpace.SMEM),         # b3 scalars
        ],
        out_specs=pl.BlockSpec((1, 2, tn), lambda b, n: (b, 0, n)),    # lane-dense output
        compiler_params=pltpu.CompilerParams(
            dimension_semantics=("parallel", "parallel"),
            # Big-tile portability: v5e's scoped default is only 16 MiB; keep well under
            # v7x's 64 MiB physical VMEM per TensorCore.
            vmem_limit_bytes=48 * 1024 * 1024),
        cost_estimate=pl.CostEstimate(
            flops=int(B * N * (2 * D * D + 8 * D)),
            transcendentals=int(2 * B * N),
            bytes_accessed=int(8 * B * N + 4 * B * D + 32 * D + 2 * D * D + 8)),
    )(lat_proj, slab, w2_bf16, b3)
    return out.reshape(B, 2, H, W)   # lane-dense channel-major output: reshape is free


# ----------------------------------------------------------------------------
# Glue (plain JAX): parameter construction + CoordGAN warp-coordinate branch.
# ----------------------------------------------------------------------------
def init_coordwarp_params(key, in_ch, out_ch, lat_dim):
    """Conv1d(k=1) weights in torch layout (O, I); deterministic synthetic values."""
    ks = jax.random.split(key, 6)
    s = lambda fan_in: 1.0 / jnp.sqrt(jnp.float32(fan_in))
    W1 = jax.random.normal(ks[0], (lat_dim, in_ch), jnp.float32) * s(in_ch)
    b1 = jax.random.normal(ks[1], (lat_dim,), jnp.float32) * s(in_ch)
    W2 = jax.random.normal(ks[2], (lat_dim, lat_dim), jnp.float32) * s(lat_dim)
    b2 = jax.random.normal(ks[3], (lat_dim,), jnp.float32) * s(lat_dim)
    W3 = jax.random.normal(ks[4], (out_ch, lat_dim), jnp.float32) * s(lat_dim)
    b3 = jax.random.normal(ks[5], (out_ch,), jnp.float32) * s(lat_dim)
    return W1, b1, W2, b2, W3, b3


def coordgan_w_to_warp_coords(struc_w, params, H, W):
    """CoordGAN warp-coordinate branch (input_is_latent=True path)."""
    W1, b1, W2, b2, W3, b3 = params
    D = W1.shape[0]
    # torch.cat((coords, lat), dim=1): W1 columns [:2] act on coords, [2:] on the latent.
    # The latent term is pixel-invariant -> one (B,S)@(S,D) matmul here, not per pixel tile.
    lat_proj = (struc_w @ W1[:, 2:].T + b1[None, :])[:, :, None]          # (B, D, 1)
    # Pack the five tiny per-step operands into a single (D, 8) slab (one DMA / BlockSpec).
    slab = jnp.zeros((D, 8), jnp.float32)
    slab = slab.at[:, 0].set(W1[:, 0])
    slab = slab.at[:, 1].set(W1[:, 1])
    slab = slab.at[:, 2].set(b2)
    slab = slab.at[:, 3].set(W3[0])
    slab = slab.at[:, 4].set(W3[1])
    return coordwarp_pallas(lat_proj, slab, W2.astype(jnp.bfloat16),
                            b3.astype(jnp.float32), H=H, W=W)


# Pure-JAX f32 reference mirroring the torch module (convert_to_coord_format + CoordWarpNet).
def coordwarp_ref(struc_w, params, H, W):
    W1, b1, W2, b2, W3, b3 = params
    B, S = struc_w.shape
    N = H * W
    x_ch = jnp.broadcast_to(jnp.linspace(-1.0, 1.0, W, dtype=jnp.float32)[None, :], (H, W))
    y_ch = jnp.broadcast_to(jnp.linspace(-1.0, 1.0, H, dtype=jnp.float32)[:, None], (H, W))
    coords = jnp.stack([x_ch.reshape(N), y_ch.reshape(N)], axis=0)   # (2, N)
    lat = jnp.broadcast_to(struc_w[:, :, None], (B, S, N))
    x = jnp.concatenate([jnp.broadcast_to(coords[None], (B, 2, N)), lat], axis=1)
    h = jnp.maximum(jnp.einsum('oi,bin->bon', W1, x) + b1[None, :, None], 0.0)
    h = jnp.maximum(jnp.einsum('oi,bin->bon', W2, h) + b2[None, :, None], 0.0)
    y = jnp.tanh(jnp.einsum('oi,bin->bon', W3, h) + b3[None, :, None])
    return y.reshape(B, 2, H, W)


if __name__ == "__main__":
    key = jax.random.PRNGKey(0)
    k_struc, k_params = jax.random.split(key)

    # Small shapes consistent with the module: foldnet = CoordWarpNet(hidden_size + 2, 2).
    B, H, W = 2, 16, 16
    style_dim = hidden_size = 32
    lat_dim = 64

    struc_w = jax.random.normal(k_struc, (B, style_dim), jnp.float32)
    params = init_coordwarp_params(k_params, hidden_size + 2, 2, lat_dim)

    warp_coords = coordgan_w_to_warp_coords(struc_w, params, H, W)
    warp_coords = jax.block_until_ready(warp_coords)
    assert warp_coords.shape == (B, 2, H, W)

    # Correctness vs pure-f32 reference. Tolerance is relaxed vs v1 because the kernel now
    # feeds bf16 operands into the MXU (f32 accumulation); errors stay at the ~1e-2 level.
    ref = coordwarp_ref(struc_w, params, H, W)
    err = float(jnp.max(jnp.abs(ref - warp_coords)))
    assert err < 5e-2, f"max abs err {err}"

    print("KERNEL_OK")
</pallas_src>

<mosaic_0001>
module attributes {stable_mosaic.version = 11 : i64} {
  func.func @coordwarp_kernel(%arg0: i32, %arg1: i32, %arg2: memref<1x64x1xf32, #tpu.memory_space<vmem>>, %arg3: memref<64x8xf32, #tpu.memory_space<vmem>>, %arg4: memref<64x64xbf16, #tpu.memory_space<vmem>>, %arg5: memref<2xf32, #tpu.memory_space<smem>>, %arg6: memref<1x2x256xf32, #tpu.memory_space<vmem>>) attributes {dimension_semantics = [#tpu.dimension_semantics<parallel>, #tpu.dimension_semantics<parallel>], iteration_bounds = array<i64: 2, 1>, scalar_prefetch = 0 : i64, scratch_operands = 0 : i64, tpu.core_type = #tpu.core_type<tc>, window_params = [{transform_indices = @transform_0, window_bounds = array<i64: 1, 64, 1>}, {pipeline_mode = #tpu.pipeline_mode<synchronous>, transform_indices = @transform_1, window_bounds = array<i64: 64, 8>}, {pipeline_mode = #tpu.pipeline_mode<synchronous>, transform_indices = @transform_2, window_bounds = array<i64: 64, 64>}, {transform_indices = @transform_3, window_bounds = array<i64: 2>}, {transform_indices = @transform_4, window_bounds = array<i64: 1, 2, 256>}]} {
    %0 = tpu.iota {dimensions = array<i32: 1>} : vector<1x256xi32>
    %c256_i32 = arith.constant 256 : i32
    %1 = arith.muli %arg1, %c256_i32 : i32
    %2 = vector.broadcast %1 : i32 to vector<1x256xi32>
    %3 = arith.addi %0, %2 : vector<1x256xi32>
    %4 = arith.sitofp %3 : vector<1x256xi32> to vector<1x256xf32>
    %cst = arith.constant 5.000000e-01 : f32
    %5 = vector.broadcast %cst : f32 to vector<1x256xf32>
    %6 = arith.addf %4, %5 : vector<1x256xf32>
    %cst_0 = arith.constant 6.250000e-02 : f32
    %7 = vector.broadcast %cst_0 : f32 to vector<1x256xf32>
    %8 = arith.mulf %6, %7 : vector<1x256xf32>
    %9 = math.floor %8 : vector<1x256xf32>
    %cst_1 = arith.constant 1.600000e+01 : f32
    %10 = vector.broadcast %cst_1 : f32 to vector<1x256xf32>
    %11 = arith.mulf %9, %10 : vector<1x256xf32>
    %12 = arith.subf %4, %11 : vector<1x256xf32>
    %cst_2 = arith.constant 0.13333334 : f32
    %13 = vector.broadcast %cst_2 : f32 to vector<1x256xf32>
    %14 = arith.mulf %12, %13 : vector<1x256xf32>
    %cst_3 = arith.constant 1.000000e+00 : f32
    %15 = vector.broadcast %cst_3 : f32 to vector<1x256xf32>
    %16 = arith.subf %14, %15 : vector<1x256xf32>
    %cst_4 = arith.constant 0.13333334 : f32
    %17 = vector.broadcast %cst_4 : f32 to vector<1x256xf32>
    %18 = arith.mulf %9, %17 : vector<1x256xf32>
    %cst_5 = arith.constant 1.000000e+00 : f32
    %19 = vector.broadcast %cst_5 : f32 to vector<1x256xf32>
    %20 = arith.subf %18, %19 : vector<1x256xf32>
    %c0 = arith.constant 0 : index
    %c0_6 = arith.constant 0 : index
    %c0_7 = arith.constant 0 : index
    %21 = vector.load %arg2[%c0, %c0_6, %c0_7] : memref<1x64x1xf32, #tpu.memory_space<vmem>>, vector<1x64x1xf32>
    %22 = vector.shape_cast %21 : vector<1x64x1xf32> to vector<64x1xf32>
    %c0_8 = arith.constant 0 : index
    %c0_9 = arith.constant 0 : index
    %23 = vector.load %arg3[%c0_8, %c0_9] : memref<64x8xf32, #tpu.memory_space<vmem>>, vector<64x1xf32>
    %c0_10 = arith.constant 0 : index
    %c1 = arith.constant 1 : index
    %24 = vector.load %arg3[%c0_10, %c1] : memref<64x8xf32, #tpu.memory_space<vmem>>, vector<64x1xf32>
    %c0_11 = arith.constant 0 : index
    %c2 = arith.constant 2 : index
    %25 = vector.load %arg3[%c0_11, %c2] : memref<64x8xf32, #tpu.memory_space<vmem>>, vector<64x1xf32>
    %c0_12 = arith.constant 0 : index
    %c3 = arith.constant 3 : index
    %26 = vector.load %arg3[%c0_12, %c3] : memref<64x8xf32, #tpu.memory_space<vmem>>, vector<64x1xf32>
    %c0_13 = arith.constant 0 : index
    %c4 = arith.constant 4 : index
    %27 = vector.load %arg3[%c0_13, %c4] : memref<64x8xf32, #tpu.memory_space<vmem>>, vector<64x1xf32>
    %28 = vector.broadcast %23 : vector<64x1xf32> to vector<64x256xf32>
    %29 = vector.broadcast %16 : vector<1x256xf32> to vector<64x256xf32>
    %30 = arith.mulf %28, %29 : vector<64x256xf32>
    %31 = vector.broadcast %24 : vector<64x1xf32> to vector<64x256xf32>
    %32 = vector.broadcast %20 : vector<1x256xf32> to vector<64x256xf32>
    %33 = arith.mulf %31, %32 : vector<64x256xf32>
    %34 = arith.addf %30, %33 : vector<64x256xf32>
    %35 = vector.broadcast %22 : vector<64x1xf32> to vector<64x256xf32>
    %36 = arith.addf %34, %35 : vector<64x256xf32>
    %cst_14 = arith.constant 0.000000e+00 : f32
    %37 = vector.broadcast %cst_14 : f32 to vector<64x256xf32>
    %38 = arith.maximumf %36, %37 : vector<64x256xf32>
    %c0_15 = arith.constant 0 : index
    %c0_16 = arith.constant 0 : index
    %39 = vector.load %arg4[%c0_15, %c0_16] : memref<64x64xbf16, #tpu.memory_space<vmem>>, vector<64x64xbf16>
    %40 = arith.truncf %38 : vector<64x256xf32> to vector<64x256xbf16>
    %cst_17 = arith.constant dense<0.000000e+00> : vector<64x256xf32>
    %41 = tpu.matmul %39, %40, %cst_17 {dimension_numbers = #tpu.dot_dimension_numbers<[1], [0], [0], [1], [0, 0, 1, 1], [], []>} : vector<64x64xbf16>, vector<64x256xbf16>, vector<64x256xf32> -> vector<64x256xf32>
    %42 = vector.broadcast %25 : vector<64x1xf32> to vector<64x256xf32>
    %43 = arith.addf %41, %42 : vector<64x256xf32>
    %cst_18 = arith.constant 0.000000e+00 : f32
    %44 = vector.broadcast %cst_18 : f32 to vector<64x256xf32>
    %45 = arith.maximumf %43, %44 : vector<64x256xf32>
    %46 = vector.broadcast %26 : vector<64x1xf32> to vector<64x256xf32>
    %47 = arith.mulf %45, %46 : vector<64x256xf32>
    %cst_19 = arith.constant dense<0.000000e+00> : vector<256xf32>
    %48 = vector.multi_reduction <add>, %47, %cst_19 [0] : vector<64x256xf32> to vector<256xf32>
    %49 = vector.shape_cast %48 : vector<256xf32> to vector<1x256xf32>
    %c0_20 = arith.constant 0 : index
    %50 = memref.load %arg5[%c0_20] : memref<2xf32, #tpu.memory_space<smem>>
    %51 = vector.broadcast %50 : f32 to vector<1x256xf32>
    %52 = arith.addf %49, %51 : vector<1x256xf32>
    %53 = vector.broadcast %27 : vector<64x1xf32> to vector<64x256xf32>
    %54 = arith.mulf %45, %53 : vector<64x256xf32>
    %cst_21 = arith.constant dense<0.000000e+00> : vector<256xf32>
    %55 = vector.multi_reduction <add>, %54, %cst_21 [0] : vector<64x256xf32> to vector<256xf32>
    %56 = vector.shape_cast %55 : vector<256xf32> to vector<1x256xf32>
    %c1_22 = arith.constant 1 : index
    %57 = memref.load %arg5[%c1_22] : memref<2xf32, #tpu.memory_space<smem>>
    %58 = vector.broadcast %57 : f32 to vector<1x256xf32>
    %59 = arith.addf %56, %58 : vector<1x256xf32>
    %60 = tpu.concatenate %52, %59 in 0 : vector<1x256xf32>, vector<1x256xf32> -> vector<2x256xf32>
    %61 = math.tanh %60 : vector<2x256xf32>
    %62 = vector.shape_cast %61 : vector<2x256xf32> to vector<1x2x256xf32>
    %c0_23 = arith.constant 0 : index
    %c0_24 = arith.constant 0 : index
    %c0_25 = arith.constant 0 : index
    %63 = vector.load %arg6[%c0_23, %c0_24, %c0_25] : memref<1x2x256xf32, #tpu.memory_space<vmem>>, vector<1x2x256xf32>
    tpu.vector_store %arg6[%c0_23, %c0_24, %c0_25], %62 {strides = array<i32>} : memref<1x2x256xf32, #tpu.memory_space<vmem>>, vector<1x2x256xf32>,
    return
  }
  func.func @transform_0(%arg0: i32, %arg1: i32) -> (i32, i32, i32) {
    %c0_i32 = arith.constant 0 : i32
    %c0_i32_0 = arith.constant 0 : i32
    %c0_i32_1 = arith.constant 0 : i32
    return %arg0, %c0_i32, %c0_i32_0 : i32, i32, i32
  }
  func.func @transform_1(%arg0: i32, %arg1: i32) -> (i32, i32) {
    %c0_i32 = arith.constant 0 : i32
    %c0_i32_0 = arith.constant 0 : i32
    %c0_i32_1 = arith.constant 0 : i32
    return %c0_i32, %c0_i32_0 : i32, i32
  }
  func.func @transform_2(%arg0: i32, %arg1: i32) -> (i32, i32) {
    %c0_i32 = arith.constant 0 : i32
    %c0_i32_0 = arith.constant 0 : i32
    %c0_i32_1 = arith.constant 0 : i32
    return %c0_i32, %c0_i32_0 : i32, i32
  }
  func.func @transform_3(%arg0: i32, %arg1: i32) -> i32 {
    %c0_i32 = arith.constant 0 : i32
    %c0_i32_0 = arith.constant 0 : i32
    return %c0_i32 : i32
  }
  func.func @transform_4(%arg0: i32, %arg1: i32) -> (i32, i32, i32) {
    %c0_i32 = arith.constant 0 : i32
    %c0_i32_0 = arith.constant 0 : i32
    return %arg0, %c0_i32, %arg1 : i32, i32, i32
  }
}

</mosaic_0001>

<llo_original>
// kernel: tpu_custom_call.1
$region0: #{tpu_custom_call.1}
  #allocation0 [shape = 'u32[]', space=smem, size = 0x4, offset = 0x4, fixed_abs, tag = 'smem constant byte address 0x4 - core index']
  #allocation1 [shape = 'u32[72,128]{1,0:T(1,128)}', space=vmem, size = 0x9000, scoped, tag = 'internal scratch']
  %s0 = inlined_call_operand.vmem [shape: f32[2,64,1], index: 0, kind: input, shape index: {}]
  %s1 = inlined_call_operand.vmem [shape: f32[64,8], index: 1, kind: input, shape index: {}]
  %s2 = inlined_call_operand.vmem [shape: bf16[64,64], index: 2, kind: input, shape index: {}]
  %s3 = inlined_call_operand.vmem [shape: f32[2], index: 3, kind: input, shape index: {}]
  %s4 = inlined_call_operand.hbm [shape: f32[2,2,256], index: 4, kind: output, shape index: {}]
  %s5 = sld [smem:[#allocation0]]
  $region53: #{tpu_custom_call.1} parent=0
    _
  %s7 = ssub.s32 1, %s5
  %s8 = scalar_select 0, %s7, %s5
  $region1: #{tpu_custom_call.1} parent=0
    #allocation2 [shape = 'u8[512]{0}', space=smem, size = 0x200, scoped, tag = 'input window, operand 3, single buffered']
    #allocation3 [shape = 's32[2]{0}', space=sflag, size = 0x8, scoped, tag = 'scoped memory for tpu_custom_call.1']
    #allocation4 [shape = 's32[2]{0}', space=sflag, size = 0x8, scoped, tag = 'scoped memory for tpu_custom_call.1']
    #allocation5 [shape = 'u8[4096]{0}', space=vmem, size = 0x1000, scoped, tag = 'output window, operand 0']
    %9 = vsyncpa [#allocation4], 0
    %10 = vsyncpa [#allocation3], 0
    %s11 = scalar_lea.sflag [#allocation3], 1
    %12 = vsyncpa %s11, 0
    loop: start=0, step=1, limit=4
    $region2: #{tpu_custom_call.1} parent=1 // loop_pre_header
      _
    $region3: #{tpu_custom_call.1} parent=1 // loop_header
      %s14 = sphi 0, %s18
      %p15 = scmp.ge.s32.totalorder %s14, 4
      %s21 = sphi 0, %s33
      %s22 = sphi 0, %s29
      %s23 = sphi 0, %s21
      %s24 = sphi 0, %s22
      %s25 = sphi 0, %s23
      %s26 = sphi 0, %s24
      %s36 = sphi 0, %s38
      %s39 = sphi 0, %s36
      %s40 = sphi 0, %s39
      %s56 = sphi 0, %s40
      %s60 = sphi 0, %s60
      %s62 = sphi 0, %s60
      %s63 = sphi 0, %s62
      %s77 = sphi 0, %s63
      %s81 = sphi 0, %s81
      %s83 = sphi 0, %s81
      %s84 = sphi 0, %s83
      %s98 = sphi 0, %s84
      %s102 = sphi 0, %s102
      %s104 = sphi 0, %s102
      %s105 = sphi 0, %s104
      %s119 = sphi 0, %s105
      %s127 = sphi 0, %s129
      %s130 = sphi 0, %s127
      %s131 = sphi 0, %s130
      %s147 = sphi 0, %s131
    $region4: #{tpu_custom_call.1} parent=1 // loop_header_branch
      %17 = sbr.rel (%p15) target = $region8
    $region5: #{tpu_custom_call.1} parent=1 // loop_body
      %s19 = ssub.s32 %s14, 1
      %s20 = ssub.s32 %s14, 2
      %s27 = sadd.s32 1, %s22
      %p28 = scmp.ge.s32.totalorder %s27, 1
      %s29 = scalar_select %p28, 0, %s27
      %s30 = sadd.s32 1, %s21
      %s31 = scalar_select %p28, %s30, %s21
      %p32 = scmp.ge.s32.totalorder %s31, 2
      %s33 = scalar_select %p32, 0, %s31
      %s34 = ssub.s32 %s21, %s33
      %p35 = scmp.eq.s32.totalorder %s34, 0
      %s37 = sadd.s32 %s36, 1
      %s38 = scalar_select %p35, %s36, %s37
      %p41 = pneg %p35
      %p42 = scmp.eq.s32.totalorder %s14, 1
      %p43 = por %p41, %p42
      %p44 = scmp.ne.s32.totalorder %s36, %s39
      %p45 = scmp.eq.s32.totalorder %s14, 0
      %p46 = por %p44, %p45
      %p47 = scmp.ne.s32.totalorder %s36, %s39
      %p48 = scmp.eq.s32.totalorder %s19, 1
      %p49 = por %p47, %p48
      %p50 = scmp.ne.s32.totalorder %s39, %s40
      %p51 = scmp.eq.s32.totalorder %s19, 0
      %p52 = por %p50, %p51
      %p53 = scmp.ne.s32.totalorder %s39, %s40
      %p54 = scmp.eq.s32.totalorder %s20, 1
      %p55 = por %p53, %p54
      %p57 = scmp.ne.s32.totalorder %s40, %s56
      %p58 = scmp.eq.s32.totalorder %s20, 0
      %p59 = por %p57, %p58
      %s61 = sadd.s32 %s60, 1
      %p64 = scmp.eq.s32.totalorder %s14, 1
      %p65 = scmp.ne.s32.totalorder %s60, %s62
      %p66 = scmp.eq.s32.totalorder %s14, 0
      %p67 = por %p65, %p66
      %p68 = scmp.ne.s32.totalorder %s60, %s62
      %p69 = scmp.eq.s32.totalorder %s19, 1
      %p70 = por %p68, %p69
      %p71 = scmp.ne.s32.totalorder %s62, %s63
      %p72 = scmp.eq.s32.totalorder %s19, 0
      %p73 = por %p71, %p72
      %p74 = scmp.ne.s32.totalorder %s62, %s63
      %p75 = scmp.eq.s32.totalorder %s20, 1
      %p76 = por %p74, %p75
      %p78 = scmp.ne.s32.totalorder %s63, %s77
      %p79 = scmp.eq.s32.totalorder %s20, 0
      %p80 = por %p78, %p79
      %s82 = sadd.s32 %s81, 1
      %p85 = scmp.eq.s32.totalorder %s14, 1
      %p86 = scmp.ne.s32.totalorder %s81, %s83
      %p87 = scmp.eq.s32.totalorder %s14, 0
      %p88 = por %p86, %p87
      %p89 = scmp.ne.s32.totalorder %s81, %s83
      %p90 = scmp.eq.s32.totalorder %s19, 1
      %p91 = por %p89, %p90
      %p92 = scmp.ne.s32.totalorder %s83, %s84
      %p93 = scmp.eq.s32.totalorder %s19, 0
      %p94 = por %p92, %p93
      %p95 = scmp.ne.s32.totalorder %s83, %s84
      %p96 = scmp.eq.s32.totalorder %s20, 1
      %p97 = por %p95, %p96
      %p99 = scmp.ne.s32.totalorder %s84, %s98
      %p100 = scmp.eq.s32.totalorder %s20, 0
      %p101 = por %p99, %p100
      %s103 = sadd.s32 %s102, 1
      %p106 = scmp.eq.s32.totalorder %s14, 1
      %p107 = scmp.ne.s32.totalorder %s102, %s104
      %p108 = scmp.eq.s32.totalorder %s14, 0
      %p109 = por %p107, %p108
      %p110 = scmp.ne.s32.totalorder %s102, %s104
      %p111 = scmp.eq.s32.totalorder %s19, 1
      %p112 = por %p110, %p111
      %p113 = scmp.ne.s32.totalorder %s104, %s105
      %p114 = scmp.eq.s32.totalorder %s19, 0
      %p115 = por %p113, %p114
      %p116 = scmp.ne.s32.totalorder %s104, %s105
      %p117 = scmp.eq.s32.totalorder %s20, 1
      %p118 = por %p116, %p117
      %p120 = scmp.ne.s32.totalorder %s105, %s119
      %p121 = scmp.eq.s32.totalorder %s20, 0
      %p122 = por %p120, %p121
      %s123 = ssub.s32 %s21, %s33
      %s124 = ssub.s32 %s22, %s29
      %s125 = sor.u32 %s123, %s124
      %p126 = scmp.eq.s32.totalorder %s125, 0
      %s128 = sadd.s32 %s127, 1
      %s129 = scalar_select %p126, %s127, %s128
      %p132 = pneg %p126
      %p133 = scmp.eq.s32.totalorder %s14, 1
      %p134 = por %p132, %p133
      %p135 = scmp.ne.s32.totalorder %s127, %s130
      %p136 = scmp.eq.s32.totalorder %s14, 0
      %p137 = por %p135, %p136
      %p138 = scmp.ne.s32.totalorder %s127, %s130
      %p139 = scmp.eq.s32.totalorder %s19, 1
      %p140 = por %p138, %p139
      %p141 = scmp.ne.s32.totalorder %s130, %s131
      %p142 = scmp.eq.s32.totalorder %s19, 0
      %p143 = por %p141, %p142
      %p144 = scmp.ne.s32.totalorder %s130, %s131
      %p145 = scmp.eq.s32.totalorder %s20, 1
      %p146 = por %p144, %p145
      %p148 = scmp.ne.s32.totalorder %s131, %s147
      %p149 = scmp.eq.s32.totalorder %s20, 0
      %p150 = por %p148, %p149
      %p151 = scmp.le.s32.totalorder 1, %s14
      %p152 = scmp.lt.s32.totalorder %s14, 3
      %p153 = pnand %p151, %p152
      %p154 = pneg %p153
      // Predicated region
      $region9: #{tpu_custom_call.1} parent=5 // pred_check
        _
      $region10: #{tpu_custom_call.1} parent=5 // pred_check_branch
        %156 = sbr.rel (%p153) target = $region12
      $region11: #{tpu_custom_call.1} parent=5 // pred_region
        %s157 = ssub.s32 %s14, 1
        // Predicated region
        $region13: #{tpu_custom_call.1} parent=11 // pred_check
          %p158 = pneg %p73
        $region14: #{tpu_custom_call.1} parent=11 // pred_check_branch
          %160 = sbr.rel (%p158) target = $region16
        $region15: #{tpu_custom_call.1} parent=11 // pred_region
          _
        $region16: #{tpu_custom_call.1} parent=11 // pred_fallthru
          _
        // Predicated region
        $region17: #{tpu_custom_call.1} parent=11 // pred_check
          %p161 = pneg %p94
        $region18: #{tpu_custom_call.1} parent=11 // pred_check_branch
          %163 = sbr.rel (%p161) target = $region20
        $region19: #{tpu_custom_call.1} parent=11 // pred_region
          _
        $region20: #{tpu_custom_call.1} parent=11 // pred_fallthru
          _
        // Predicated region
        $region21: #{tpu_custom_call.1} parent=11 // pred_check
          %p164 = pneg %p115
        $region22: #{tpu_custom_call.1} parent=11 // pred_check_branch
          %166 = sbr.rel (%p164) target = $region24
        $region23: #{tpu_custom_call.1} parent=11 // pred_region
          %168 = vsyncadd [#allocation4], 0
          %s170 = sshll.u32 %s3, 4
          %s171 = int_to_ptr.vmem [resolvable:$true] %s170
          %173 = dma.vmem_to_smem %s171, 16, [#allocation2], [#allocation4]
        $region24: #{tpu_custom_call.1} parent=11 // pred_fallthru
          _
      $region12: #{tpu_custom_call.1} parent=5 // pred_fallthru
        _
      %p174 = scmp.lt.s32.totalorder %s14, 2
      // Predicated region
      $region25: #{tpu_custom_call.1} parent=5 // pred_check
        %p175 = pneg %p174
      $region26: #{tpu_custom_call.1} parent=5 // pred_check_branch
        %177 = sbr.rel (%p175) target = $region28
      $region27: #{tpu_custom_call.1} parent=5 // pred_region
        // Predicated region
        $region29: #{tpu_custom_call.1} parent=27 // pred_check
          %p178 = pneg %p46
        $region30: #{tpu_custom_call.1} parent=27 // pred_check_branch
          %180 = sbr.rel (%p178) target = $region32
        $region31: #{tpu_custom_call.1} parent=27 // pred_region
          %p181 = scmp.lt.s32.totalorder %s21, 1
          %s182 = scalar_select %p181, %s21, 1
          %s183 = smul.addr %s182, 8
          %s184 = smul.addr %s183, 8
          %s185 = scalar_lea.vmem %s0, %s184
        $region32: #{tpu_custom_call.1} parent=27 // pred_fallthru
          _
      $region28: #{tpu_custom_call.1} parent=5 // pred_fallthru
        _
      %p186 = scmp.le.s32.totalorder 1, %s14
      %p187 = scmp.lt.s32.totalorder %s14, 3
      %p188 = pnand %p186, %p187
      %p189 = pneg %p188
      // Predicated region
      $region33: #{tpu_custom_call.1} parent=5 // pred_check
        _
      $region34: #{tpu_custom_call.1} parent=5 // pred_check_branch
        %191 = sbr.rel (%p188) target = $region36
      $region35: #{tpu_custom_call.1} parent=5 // pred_region
        %s192 = ssub.s32 %s14, 1
        // Predicated region
        $region37: #{tpu_custom_call.1} parent=35 // pred_check
          %p193 = pneg %p115
        $region38: #{tpu_custom_call.1} parent=35 // pred_check_branch
          %195 = sbr.rel (%p193) target = $region40
        $region39: #{tpu_custom_call.1} parent=35 // pred_region
          %197 = dma.done [#allocation4], 16
        $region40: #{tpu_custom_call.1} parent=35 // pred_fallthru
          _
        %198 = sfence
        %p199 = scmp.lt.s32.totalorder %s23, 1
        %s200 = scalar_select %p199, %s23, 1
        %s201 = smul.addr %s200, 8
        %s202 = smul.addr %s201, 8
        %s203 = scalar_lea.vmem %s0, %s202
        %p204 = pneg %p52
        %p205 = pneg %p49
        %p206 = pneg %p73
        %p207 = pneg %p70
        %p208 = pneg %p94
        %p209 = pneg %p91
        %p210 = pneg %p115
        %p211 = pneg %p112
        %p212 = pneg %p143
        %p213 = pneg %p140
        %s214 = sand.u32 %s130, 1
        %s215 = scalar_lea.sflag [#allocation3], %s214
        %s216 = sand.u32 %s130, 1
        %s217 = smul.addr %s216, 4
        %s218 = scalar_lea.vmem [#allocation5], %s217
        %p219 = scmp.lt.s32.totalorder %s23, 1
        %s220 = scalar_select %p219, %s23, 1
        %s221 = smul.addr %s220, 8
        %s222 = smul.addr %s221, 8
        %s223 = scalar_lea.vmem %s0, %s222
        %s224 = smul.u32 2, %s24
        %v226 = vlaneseq
        %v227 = vand.u32 %v226, 127
        %v228 = vadd.s32 %v227, 128
        %s229 = smul.u32 %s24, 256
        %v230 = vstv %s229
        %v231 = vadd.s32 %v227, %v230
        %v232 = vadd.s32 %v228, %v230
        %v233 = vcvt.s32.f32 %v231
        %v234 = vcvt.s32.f32 %v232
        %v235 = vadd.f32 %v233, 0.5
        %v236 = vadd.f32 %v234, 0.5
        %v237 = vmul.f32 %v235, 0.0625
        %v238 = vmul.f32 %v236, 0.0625
        %v239 = vfloor.f32 %v237
        %v240 = vfloor.f32 %v238
        %v241 = vmul.f32 %v239, 16.0
        %v242 = vmul.f32 %v240, 16.0
        %v243 = vsub.f32 %v233, %v241
        %v244 = vsub.f32 %v234, %v242
        %v245 = vmul.f32 %v243, 0.13333334
        %v246 = vmul.f32 %v244, 0.13333334
        %v247 = vsub.f32 %v245, 1.0
        %v248 = vsub.f32 %v246, 1.0
        %v249 = vmul.f32 %v239, 0.13333334
        %v250 = vmul.f32 %v240, 0.13333334
        %v251 = vsub.f32 %v249, 1.0
        %v252 = vsub.f32 %v250, 1.0
        %v253 = vld [vmem:[%s223] sm:$0xff]
        %v254 = vld [vmem:[%s223 + $0x8] sm:$0xff]
        %v255 = vld [vmem:[%s223 + $0x10] sm:$0xff]
        %v256 = vld [vmem:[%s223 + $0x18] sm:$0xff]
        %v257 = vld [vmem:[%s223 + $0x20] sm:$0xff]
        %v258 = vld [vmem:[%s223 + $0x28] sm:$0xff]
        %v259 = vld [vmem:[%s223 + $0x30] sm:$0xff]
        %v260 = vld [vmem:[%s223 + $0x38] sm:$0xff]
        %v261 = vld [vmem:[%s1] sm:$0xff]
        %v262 = vld [vmem:[%s1 + $0x8] sm:$0xff]
        %v263 = vld [vmem:[%s1 + $0x10] sm:$0xff]
        %v264 = vld [vmem:[%s1 + $0x18] sm:$0xff]
        %v265 = vld [vmem:[%s1 + $0x20] sm:$0xff]
        %v266 = vld [vmem:[%s1 + $0x28] sm:$0xff]
        %v267 = vld [vmem:[%s1 + $0x30] sm:$0xff]
        %v268 = vld [vmem:[%s1 + $0x38] sm:$0xff]
        %270 = vset.pattern.permute.xlu0 0
        %271 = vperm.xlu0 %270, %v261
        %v272 = vpop.permute.xlu0 %271
        %275 = vset.pattern.permute.xlu0 0
        %276 = vperm.xlu0 %275, %v262
        %v277 = vpop.permute.xlu0 %276
        %280 = vset.pattern.permute.xlu0 0
        %281 = vperm.xlu0 %280, %v263
        %v282 = vpop.permute.xlu0 %281
        %285 = vset.pattern.permute.xlu0 0
        %286 = vperm.xlu0 %285, %v264
        %v287 = vpop.permute.xlu0 %286
        %290 = vset.pattern.permute.xlu0 0
        %291 = vperm.xlu0 %290, %v265
        %v292 = vpop.permute.xlu0 %291
        %295 = vset.pattern.permute.xlu0 0
        %296 = vperm.xlu0 %295, %v266
        %v297 = vpop.permute.xlu0 %296
        %300 = vset.pattern.permute.xlu0 0
        %301 = vperm.xlu0 %300, %v267
        %v302 = vpop.permute.xlu0 %301
        %305 = vset.pattern.permute.xlu0 0
        %306 = vperm.xlu0 %305, %v268
        %v307 = vpop.permute.xlu0 %306
        %v309 = vmul.f32 %v272, %v247
        %v310 = vmul.f32 %v272, %v248
        %v311 = vmul.f32 %v277, %v247
        %v312 = vmul.f32 %v277, %v248
        %v313 = vmul.f32 %v282, %v247
        %v314 = vmul.f32 %v282, %v248
        %v315 = vmul.f32 %v287, %v247
        %v316 = vmul.f32 %v287, %v248
        %v317 = vmul.f32 %v292, %v247
        %v318 = vmul.f32 %v292, %v248
        %v319 = vmul.f32 %v297, %v247
        %v320 = vmul.f32 %v297, %v248
        %v321 = vmul.f32 %v302, %v247
        %v322 = vmul.f32 %v302, %v248
        %v323 = vmul.f32 %v307, %v247
        %v324 = vmul.f32 %v307, %v248
        %325 = vset.pattern.permute.xlu0 1
        %326 = vperm.xlu0 %325, %v261
        %v327 = vpop.permute.xlu0 %326
        %329 = vset.pattern.permute.xlu0 1
        %330 = vperm.xlu0 %329, %v262
        %v331 = vpop.permute.xlu0 %330
        %333 = vset.pattern.permute.xlu0 1
        %334 = vperm.xlu0 %333, %v263
        %v335 = vpop.permute.xlu0 %334
        %337 = vset.pattern.permute.xlu0 1
        %338 = vperm.xlu0 %337, %v264
        %v339 = vpop.permute.xlu0 %338
        %341 = vset.pattern.permute.xlu0 1
        %342 = vperm.xlu0 %341, %v265
        %v343 = vpop.permute.xlu0 %342
        %345 = vset.pattern.permute.xlu0 1
        %346 = vperm.xlu0 %345, %v266
        %v347 = vpop.permute.xlu0 %346
        %349 = vset.pattern.permute.xlu0 1
        %350 = vperm.xlu0 %349, %v267
        %v351 = vpop.permute.xlu0 %350
        %353 = vset.pattern.permute.xlu0 1
        %354 = vperm.xlu0 %353, %v268
        %v355 = vpop.permute.xlu0 %354
        %v357 = vmul.f32 %v327, %v251
        %v358 = vmul.f32 %v327, %v252
        %v359 = vmul.f32 %v331, %v251
        %v360 = vmul.f32 %v331, %v252
        %v361 = vmul.f32 %v335, %v251
        %v362 = vmul.f32 %v335, %v252
        %v363 = vmul.f32 %v339, %v251
        %v364 = vmul.f32 %v339, %v252
        %v365 = vmul.f32 %v343, %v251
        %v366 = vmul.f32 %v343, %v252
        %v367 = vmul.f32 %v347, %v251
        %v368 = vmul.f32 %v347, %v252
        %v369 = vmul.f32 %v351, %v251
        %v370 = vmul.f32 %v351, %v252
        %v371 = vmul.f32 %v355, %v251
        %v372 = vmul.f32 %v355, %v252
        %v373 = vadd.f32 %v309, %v357
        %v374 = vadd.f32 %v310, %v358
        %v375 = vadd.f32 %v311, %v359
        %v376 = vadd.f32 %v312, %v360
        %v377 = vadd.f32 %v313, %v361
        %v378 = vadd.f32 %v314, %v362
        %v379 = vadd.f32 %v315, %v363
        %v380 = vadd.f32 %v316, %v364
        %v381 = vadd.f32 %v317, %v365
        %v382 = vadd.f32 %v318, %v366
        %v383 = vadd.f32 %v319, %v367
        %v384 = vadd.f32 %v320, %v368
        %v385 = vadd.f32 %v321, %v369
        %v386 = vadd.f32 %v322, %v370
        %v387 = vadd.f32 %v323, %v371
        %v388 = vadd.f32 %v324, %v372
        %390 = vset.pattern.permute.xlu0 0
        %391 = vperm.xlu0 %390, %v253
        %v392 = vpop.permute.xlu0 %391
        %395 = vset.pattern.permute.xlu0 0
        %396 = vperm.xlu0 %395, %v254
        %v397 = vpop.permute.xlu0 %396
        %400 = vset.pattern.permute.xlu0 0
        %401 = vperm.xlu0 %400, %v255
        %v402 = vpop.permute.xlu0 %401
        %405 = vset.pattern.permute.xlu0 0
        %406 = vperm.xlu0 %405, %v256
        %v407 = vpop.permute.xlu0 %406
        %410 = vset.pattern.permute.xlu0 0
        %411 = vperm.xlu0 %410, %v257
        %v412 = vpop.permute.xlu0 %411
        %415 = vset.pattern.permute.xlu0 0
        %416 = vperm.xlu0 %415, %v258
        %v417 = vpop.permute.xlu0 %416
        %420 = vset.pattern.permute.xlu0 0
        %421 = vperm.xlu0 %420, %v259
        %v422 = vpop.permute.xlu0 %421
        %425 = vset.pattern.permute.xlu0 0
        %426 = vperm.xlu0 %425, %v260
        %v427 = vpop.permute.xlu0 %426
        %v429 = vadd.f32 %v373, %v392
        %v430 = vadd.f32 %v374, %v392
        %v431 = vadd.f32 %v375, %v397
        %v432 = vadd.f32 %v376, %v397
        %v433 = vadd.f32 %v377, %v402
        %v434 = vadd.f32 %v378, %v402
        %v435 = vadd.f32 %v379, %v407
        %v436 = vadd.f32 %v380, %v407
        %v437 = vadd.f32 %v381, %v412
        %v438 = vadd.f32 %v382, %v412
        %v439 = vadd.f32 %v383, %v417
        %v440 = vadd.f32 %v384, %v417
        %v441 = vadd.f32 %v385, %v422
        %v442 = vadd.f32 %v386, %v422
        %v443 = vadd.f32 %v387, %v427
        %v444 = vadd.f32 %v388, %v427
        %v445 = vmax.f32 %v429, 0.0
        %v446 = vmax.f32 %v430, 0.0
        %v447 = vmax.f32 %v431, 0.0
        %v448 = vmax.f32 %v432, 0.0
        %v449 = vmax.f32 %v433, 0.0
        %v450 = vmax.f32 %v434, 0.0
        %v451 = vmax.f32 %v435, 0.0
        %v452 = vmax.f32 %v436, 0.0
        %v453 = vmax.f32 %v437, 0.0
        %v454 = vmax.f32 %v438, 0.0
        %v455 = vmax.f32 %v439, 0.0
        %v456 = vmax.f32 %v440, 0.0
        %v457 = vmax.f32 %v441, 0.0
        %v458 = vmax.f32 %v442, 0.0
        %v459 = vmax.f32 %v443, 0.0
        %v460 = vmax.f32 %v444, 0.0
        %v461 = vld [vmem:[%s2] sm:$0xf]
        %v462 = vld [vmem:[%s2 + $0x4] sm:$0xf]
        %v463 = vld [vmem:[%s2 + $0x8] sm:$0xf]
        %v464 = vld [vmem:[%s2 + $0xc] sm:$0xf]
        %v465 = vld [vmem:[%s2 + $0x10] sm:$0xf]
        %v466 = vld [vmem:[%s2 + $0x14] sm:$0xf]
        %v467 = vld [vmem:[%s2 + $0x18] sm:$0xf]
        %v468 = vld [vmem:[%s2 + $0x1c] sm:$0xf]
        %v469 = vpack.c.bf16 %v447, %v445
        %v470 = vpack.c.bf16 %v448, %v446
        %v471 = vpack.c.bf16 %v451, %v449
        %v472 = vpack.c.bf16 %v452, %v450
        %v473 = vpack.c.bf16 %v455, %v453
        %v474 = vpack.c.bf16 %v456, %v454
        %v475 = vpack.c.bf16 %v459, %v457
        %v476 = vpack.c.bf16 %v460, %v458
        %477 = vset.pattern.permute.xlu0 2
        %478 = vperm.xlu0 %477, %v261
        %v479 = vpop.permute.xlu0 %478
        %481 = vset.pattern.permute.xlu0 2
        %482 = vperm.xlu0 %481, %v262
        %v483 = vpop.permute.xlu0 %482
        %485 = vset.pattern.permute.xlu0 2
        %486 = vperm.xlu0 %485, %v263
        %v487 = vpop.permute.xlu0 %486
        %489 = vset.pattern.permute.xlu0 2
        %490 = vperm.xlu0 %489, %v264
        %v491 = vpop.permute.xlu0 %490
        %493 = vset.pattern.permute.xlu0 2
        %494 = vperm.xlu0 %493, %v265
        %v495 = vpop.permute.xlu0 %494
        %497 = vset.pattern.permute.xlu0 2
        %498 = vperm.xlu0 %497, %v266
        %v499 = vpop.permute.xlu0 %498
        %501 = vset.pattern.permute.xlu0 2
        %502 = vperm.xlu0 %501, %v267
        %v503 = vpop.permute.xlu0 %502
        %505 = vset.pattern.permute.xlu0 2
        %506 = vperm.xlu0 %505, %v268
        %v507 = vpop.permute.xlu0 %506
        %v517 = vunpack.c.l.b16 %v461
        %v518 = vunpack.c.l.b16 %v462
        %v519 = vunpack.c.l.b16 %v463
        %v520 = vunpack.c.l.b16 %v464
        %v521 = vunpack.c.l.b16 %v465
        %v522 = vunpack.c.l.b16 %v466
        %v523 = vunpack.c.l.b16 %v467
        %v524 = vunpack.c.l.b16 %v468
        %v525 = vpack.c.b16 %v518, %v517
        %v526 = vpack.c.b16 %v520, %v519
        %v527 = vpack.c.b16 %v522, %v521
        %v528 = vpack.c.b16 %v524, %v523
        %vm529 = vcmask 523264
        %v531 = vsel %vm529, %v525, 0
        %v534 = vsel %vm529, %v526, 0
        %v537 = vsel %vm529, %v527, 0
        %v540 = vsel %vm529, %v528, 0
        %542 = vmatpush.bf16.msra.mxu0 0
        %543 = vmatpush.bf16.msra.mxu0 0
        %544 = vmatpush.bf16.msra.mxu0 0
        %545 = vmatpush.bf16.msra.mxu0 0
        %546 = vmatpush.bf16.msra.mxu0 %v475
        %547 = vmatpush.bf16.msra.mxu0 %v473
        %548 = vmatpush.bf16.msra.mxu0 %v471
        %549 = vmatpush.bf16.msra.mxu0 %v469
        %550 = vmatmul.bf16.gmra.mxu0 %v531
        %v551 = vpop.f32.mrf.mxu0
        %v552 = vadd.f32 %v479, %v551
        %v553 = vpop.f32.mrf.mxu0
        %v554 = vadd.f32 %v483, %v553
        %555 = vmatmul.bf16.gmra.mxu0 %v534
        %v556 = vpop.f32.mrf.mxu0
        %v557 = vadd.f32 %v487, %v556
        %v558 = vpop.f32.mrf.mxu0
        %v559 = vadd.f32 %v491, %v558
        %560 = vmatmul.bf16.gmra.mxu0 %v537
        %v561 = vpop.f32.mrf.mxu0
        %v562 = vadd.f32 %v495, %v561
        %v563 = vpop.f32.mrf.mxu0
        %v564 = vadd.f32 %v499, %v563
        %565 = vmatmul.bf16.gmra.mxu0 %v540
        %v566 = vpop.f32.mrf.mxu0
        %v567 = vadd.f32 %v503, %v566
        %v568 = vpop.f32.mrf.mxu0
        %v569 = vadd.f32 %v507, %v568
        %570 = vdwg.mxu0
        %571 = vmatpush.bf16.msra.mxu0 0
        %572 = vmatpush.bf16.msra.mxu0 0
        %573 = vmatpush.bf16.msra.mxu0 0
        %574 = vmatpush.bf16.msra.mxu0 0
        %575 = vmatpush.bf16.msra.mxu0 %v476
        %576 = vmatpush.bf16.msra.mxu0 %v474
        %577 = vmatpush.bf16.msra.mxu0 %v472
        %578 = vmatpush.bf16.msra.mxu0 %v470
        %579 = vmatmul.bf16.gmra.mxu0 %v531
        %v580 = vpop.f32.mrf.mxu0
        %v581 = vadd.f32 %v479, %v580
        %v582 = vpop.f32.mrf.mxu0
        %v583 = vadd.f32 %v483, %v582
        %584 = vmatmul.bf16.gmra.mxu0 %v534
        %v585 = vpop.f32.mrf.mxu0
        %v586 = vadd.f32 %v487, %v585
        %v587 = vpop.f32.mrf.mxu0
        %v588 = vadd.f32 %v491, %v587
        %589 = vmatmul.bf16.gmra.mxu0 %v537
        %v590 = vpop.f32.mrf.mxu0
        %v591 = vadd.f32 %v495, %v590
        %v592 = vpop.f32.mrf.mxu0
        %v593 = vadd.f32 %v499, %v592
        %594 = vmatmul.bf16.gmra.mxu0 %v540
        %v595 = vpop.f32.mrf.mxu0
        %v596 = vadd.f32 %v503, %v595
        %v597 = vpop.f32.mrf.mxu0
        %v598 = vadd.f32 %v507, %v597
        %599 = vdwg.mxu0
        %v600 = vmax.f32 %v552, 0.0
        %v601 = vmax.f32 %v581, 0.0
        %v602 = vmax.f32 %v554, 0.0
        %v603 = vmax.f32 %v583, 0.0
        %v604 = vmax.f32 %v557, 0.0
        %v605 = vmax.f32 %v586, 0.0
        %v606 = vmax.f32 %v559, 0.0
        %v607 = vmax.f32 %v588, 0.0
        %v608 = vmax.f32 %v562, 0.0
        %v609 = vmax.f32 %v591, 0.0
        %v610 = vmax.f32 %v564, 0.0
        %v611 = vmax.f32 %v593, 0.0
        %v612 = vmax.f32 %v567, 0.0
        %v613 = vmax.f32 %v596, 0.0
        %v614 = vmax.f32 %v569, 0.0
        %v615 = vmax.f32 %v598, 0.0
        %616 = vset.pattern.permute.xlu0 3
        %617 = vperm.xlu0 %616, %v261
        %v618 = vpop.permute.xlu0 %617
        %620 = vset.pattern.permute.xlu0 3
        %621 = vperm.xlu0 %620, %v262
        %v622 = vpop.permute.xlu0 %621
        %624 = vset.pattern.permute.xlu0 3
        %625 = vperm.xlu0 %624, %v263
        %v626 = vpop.permute.xlu0 %625
        %628 = vset.pattern.permute.xlu0 3
        %629 = vperm.xlu0 %628, %v264
        %v630 = vpop.permute.xlu0 %629
        %632 = vset.pattern.permute.xlu0 3
        %633 = vperm.xlu0 %632, %v265
        %v634 = vpop.permute.xlu0 %633
        %636 = vset.pattern.permute.xlu0 3
        %637 = vperm.xlu0 %636, %v266
        %v638 = vpop.permute.xlu0 %637
        %640 = vset.pattern.permute.xlu0 3
        %641 = vperm.xlu0 %640, %v267
        %v642 = vpop.permute.xlu0 %641
        %644 = vset.pattern.permute.xlu0 3
        %645 = vperm.xlu0 %644, %v268
        %v646 = vpop.permute.xlu0 %645
        %v648 = vmul.f32 %v600, %v618
        %v649 = vmul.f32 %v601, %v618
        %v650 = vmul.f32 %v602, %v622
        %v651 = vmul.f32 %v603, %v622
        %v652 = vmul.f32 %v604, %v626
        %v653 = vmul.f32 %v605, %v626
        %v654 = vmul.f32 %v606, %v630
        %v655 = vmul.f32 %v607, %v630
        %v656 = vmul.f32 %v608, %v634
        %v657 = vmul.f32 %v609, %v634
        %v658 = vmul.f32 %v610, %v638
        %v659 = vmul.f32 %v611, %v638
        %v660 = vmul.f32 %v612, %v642
        %v661 = vmul.f32 %v613, %v642
        %v662 = vmul.f32 %v614, %v646
        %v663 = vmul.f32 %v615, %v646
        %v664 = vadd.f32 %v648, %v650
        %v665 = vadd.f32 %v664, %v652
        %v666 = vadd.f32 %v665, %v654
        %v667 = vadd.f32 %v666, %v656
        %v668 = vadd.f32 %v667, %v658
        %v669 = vadd.f32 %v668, %v660
        %v670 = vadd.f32 %v669, %v662
        %v671 = vrot.slane %v670, 4
        %v672 = vadd.f32 %v670, %v671
        %v673 = vrot.slane %v672, 2
        %v674 = vadd.f32 %v672, %v673
        %v675 = vrot.slane %v674, 1
        %v676 = vadd.f32 %v674, %v675
        %v677 = vadd.f32 %v649, %v651
        %v678 = vadd.f32 %v677, %v653
        %v679 = vadd.f32 %v678, %v655
        %v680 = vadd.f32 %v679, %v657
        %v681 = vadd.f32 %v680, %v659
        %v682 = vadd.f32 %v681, %v661
        %v683 = vadd.f32 %v682, %v663
        %v684 = vrot.slane %v683, 4
        %v685 = vadd.f32 %v683, %v684
        %v686 = vrot.slane %v685, 2
        %v687 = vadd.f32 %v685, %v686
        %v688 = vrot.slane %v687, 1
        %v689 = vadd.f32 %v687, %v688
        %s690 = sld [smem:[#allocation2]]
        %v691 = vstv %s690
        %v692 = vadd.f32 %v676, %v691
        %v693 = vadd.f32 %v689, %v691
        %694 = vset.pattern.permute.xlu0 4
        %695 = vperm.xlu0 %694, %v261
        %v696 = vpop.permute.xlu0 %695
        %698 = vset.pattern.permute.xlu0 4
        %699 = vperm.xlu0 %698, %v262
        %v700 = vpop.permute.xlu0 %699
        %702 = vset.pattern.permute.xlu0 4
        %703 = vperm.xlu0 %702, %v263
        %v704 = vpop.permute.xlu0 %703
        %706 = vset.pattern.permute.xlu0 4
        %707 = vperm.xlu0 %706, %v264
        %v708 = vpop.permute.xlu0 %707
        %710 = vset.pattern.permute.xlu0 4
        %711 = vperm.xlu0 %710, %v265
        %v712 = vpop.permute.xlu0 %711
        %714 = vset.pattern.permute.xlu0 4
        %715 = vperm.xlu0 %714, %v266
        %v716 = vpop.permute.xlu0 %715
        %718 = vset.pattern.permute.xlu0 4
        %719 = vperm.xlu0 %718, %v267
        %v720 = vpop.permute.xlu0 %719
        %722 = vset.pattern.permute.xlu0 4
        %723 = vperm.xlu0 %722, %v268
        %v724 = vpop.permute.xlu0 %723
        %v726 = vmul.f32 %v600, %v696
        %v727 = vmul.f32 %v601, %v696
        %v728 = vmul.f32 %v602, %v700
        %v729 = vmul.f32 %v603, %v700
        %v730 = vmul.f32 %v604, %v704
        %v731 = vmul.f32 %v605, %v704
        %v732 = vmul.f32 %v606, %v708
        %v733 = vmul.f32 %v607, %v708
        %v734 = vmul.f32 %v608, %v712
        %v735 = vmul.f32 %v609, %v712
        %v736 = vmul.f32 %v610, %v716
        %v737 = vmul.f32 %v611, %v716
        %v738 = vmul.f32 %v612, %v720
        %v739 = vmul.f32 %v613, %v720
        %v740 = vmul.f32 %v614, %v724
        %v741 = vmul.f32 %v615, %v724
        %v742 = vadd.f32 %v726, %v728
        %v743 = vadd.f32 %v742, %v730
        %v744 = vadd.f32 %v743, %v732
        %v745 = vadd.f32 %v744, %v734
        %v746 = vadd.f32 %v745, %v736
        %v747 = vadd.f32 %v746, %v738
        %v748 = vadd.f32 %v747, %v740
        %v749 = vrot.slane %v748, 4
        %v750 = vadd.f32 %v748, %v749
        %v751 = vrot.slane %v750, 2
        %v752 = vadd.f32 %v750, %v751
        %v753 = vrot.slane %v752, 1
        %v754 = vadd.f32 %v752, %v753
        %v755 = vadd.f32 %v727, %v729
        %v756 = vadd.f32 %v755, %v731
        %v757 = vadd.f32 %v756, %v733
        %v758 = vadd.f32 %v757, %v735
        %v759 = vadd.f32 %v758, %v737
        %v760 = vadd.f32 %v759, %v739
        %v761 = vadd.f32 %v760, %v741
        %v762 = vrot.slane %v761, 4
        %v763 = vadd.f32 %v761, %v762
        %v764 = vrot.slane %v763, 2
        %v765 = vadd.f32 %v763, %v764
        %v766 = vrot.slane %v765, 1
        %v767 = vadd.f32 %v765, %v766
        %s768 = sld [smem:[#allocation2 + $0x1]]
        %v769 = vstv %s768
        %v770 = vadd.f32 %v754, %v769
        %v771 = vadd.f32 %v767, %v769
        %vm772 = vcmask 1040384
        %v773 = vsel %vm772, %v692, %v770
        %v774 = vsel %vm772, %v693, %v771
        %v775 = vtanh.pop %v773
        %v776 = vtanh.pop %v774
        %v779 = vrot.slane %v776, 6
        %vm780 = vcmask 1041408
        %v781 = vsel %vm780, %v775, %v779
        %783 = vst [vmem:[%s218] sm:$0xf] %v781
        %s784 = sand.u32 %s130, 1
        %s785 = scalar_lea.sflag [#allocation3], %s784
        %s786 = sand.u32 %s130, 1
        %s787 = smul.addr %s786, 4
        %s788 = scalar_lea.vmem [#allocation5], %s787
        // Predicated region
        $region41: #{tpu_custom_call.1} parent=35 // pred_check
          %p789 = pneg %p140
        $region42: #{tpu_custom_call.1} parent=35 // pred_check_branch
          %791 = sbr.rel (%p789) target = $region44
        $region43: #{tpu_custom_call.1} parent=35 // pred_region
          %s792 = smul.u32 2, %s24
          %794 = vsyncadd %s785, 0
          %s795 = smul.addr %s23, 2
          %s796 = sadd.s32 %s792, %s795
          %s797 = smul.addr %s796, 2
          %s798 = scalar_lea.hbm %s4, %s797
          %s800 = sshll.u32 %s788, 4
          %s801 = int_to_ptr.vmem [resolvable:$true] %s800
          %s802 = sshll.u32 %s798, 4
          %s803 = int_to_ptr.hbm [resolvable:$true] %s802
          %805 = dma.vmem_to_hbm [thread:$0]  %s801, 64, %s803, %s785
        $region44: #{tpu_custom_call.1} parent=35 // pred_fallthru
          _
      $region36: #{tpu_custom_call.1} parent=5 // pred_fallthru
        _
      %p806 = scmp.le.s32.totalorder 2, %s14
      // Predicated region
      $region45: #{tpu_custom_call.1} parent=5 // pred_check
        %p807 = pneg %p806
      $region46: #{tpu_custom_call.1} parent=5 // pred_check_branch
        %809 = sbr.rel (%p807) target = $region48
      $region47: #{tpu_custom_call.1} parent=5 // pred_region
        %s810 = ssub.s32 %s14, 2
        // Predicated region
        $region49: #{tpu_custom_call.1} parent=47 // pred_check
          %p811 = pneg %p146
        $region50: #{tpu_custom_call.1} parent=47 // pred_check_branch
          %813 = sbr.rel (%p811) target = $region52
        $region51: #{tpu_custom_call.1} parent=47 // pred_region
          %s814 = sand.u32 %s131, 1
          %s815 = scalar_lea.sflag [#allocation3], %s814
          %s816 = sand.u32 %s131, 1
          %s817 = smul.addr %s816, 4
          %s818 = scalar_lea.vmem [#allocation5], %s817
          %820 = dma.done %s815, 64
        $region52: #{tpu_custom_call.1} parent=47 // pred_fallthru
          _
      $region48: #{tpu_custom_call.1} parent=5 // pred_fallthru
        _
    $region6: #{tpu_custom_call.1} parent=1 // loop_footer
      %s18 = sadd.s32 1, %s14
    $region7: #{tpu_custom_call.1} parent=1 // loop_footer_branch
      %13 = sbr.rel target = $region3
    $region8: #{tpu_custom_call.1} parent=1 // loop_exit
      _
    %821 = vsyncpa [#allocation3], 1
    %s822 = scalar_lea.sflag [#allocation3], 1
    %823 = vsyncpa %s822, 1
    %824 = vsyncpa [#allocation4], 1
    %s825 = scalar_lea.sflag [#allocation4], 1
    %826 = vsyncpa %s825, 1

</llo_original>
